<compile_context>
chip_gen: v6e
topology: v6e:2x2x1
jax: 0.10.0
libtpu: 0.0.40
codegen_flags: <defaults>
</compile_context>

<pallas_src>
import jax
import jax.numpy as jnp
from jax.experimental import pallas as pl
from jax.experimental.pallas import tpu as pltpu

_LANES = 128


def _relu_kernel(x_ref, o_ref):
    # Elementwise max(x, 0) on the VPU over the whole VMEM slab.
    o_ref[...] = jnp.maximum(x_ref[...], 0)


def _relu_pallas_impl(x: jax.Array) -> jax.Array:
    """ReLU over an arbitrary-shape array via a lane-dense Pallas kernel."""
    orig_shape = x.shape
    dtype = x.dtype
    n = x.size

    # Lane-dense 2D slab. For the module's shape (94080 elements) this is an
    # exact reshape to (735, 128) with no padding and no extra HBM copies.
    pad = (-n) % _LANES
    flat = x.reshape(-1)
    if pad:
        flat = jnp.pad(flat, (0, pad))
    slab = flat.reshape((n + pad) // _LANES, _LANES)

    out_slab = pl.pallas_call(
        _relu_kernel,
        out_shape=jax.ShapeDtypeStruct(slab.shape, dtype),
        in_specs=[pl.BlockSpec(memory_space=pltpu.MemorySpace.VMEM)],
        out_specs=pl.BlockSpec(memory_space=pltpu.MemorySpace.VMEM),
        input_output_aliases={0: 0},  # in-place ReLU on the slab buffer
    )(slab)

    if pad:
        out_slab = out_slab.reshape(-1)[:n]
    return out_slab.reshape(orig_shape)


relu_pallas = jax.jit(_relu_pallas_impl)


if __name__ == "__main__":
    # Input shape taken from the module: x119 ~ [1, 480, 14, 14]
    key = jax.random.PRNGKey(0)
    x119 = jax.random.normal(key, (1, 480, 14, 14), dtype=jnp.float32)

    out = relu_pallas(x119)
    jax.block_until_ready(out)

    # Sanity check against the pure-JAX reference.
    ref = jnp.maximum(x119, 0.0)
    assert out.shape == x119.shape
    assert out.dtype == x119.dtype
    assert bool(jnp.allclose(out, ref))

    print("KERNEL_OK")
</pallas_src>

<mosaic_0001>
module attributes {stable_mosaic.version = 11 : i64} {
  func.func @_relu_kernel(%arg0: memref<735x128xf32, #tpu.memory_space<vmem>>, %arg1: memref<735x128xf32, #tpu.memory_space<vmem>>) attributes {dimension_semantics = [], scalar_prefetch = 0 : i64, scratch_operands = 0 : i64, tpu.core_type = #tpu.core_type<tc>} {
    %c0 = arith.constant 0 : index
    %c0_0 = arith.constant 0 : index
    %0 = vector.load %arg0[%c0, %c0_0] : memref<735x128xf32, #tpu.memory_space<vmem>>, vector<735x128xf32>
    %cst = arith.constant 0.000000e+00 : f32
    %1 = vector.broadcast %cst : f32 to vector<735x128xf32>
    %2 = arith.maximumf %0, %1 : vector<735x128xf32>
    %c0_1 = arith.constant 0 : index
    %c0_2 = arith.constant 0 : index
    %3 = vector.load %arg1[%c0_1, %c0_2] : memref<735x128xf32, #tpu.memory_space<vmem>>, vector<735x128xf32>
    tpu.vector_store %arg1[%c0_1, %c0_2], %2 {strides = array<i32>} : memref<735x128xf32, #tpu.memory_space<vmem>>, vector<735x128xf32>,
    return
  }
}

</mosaic_0001>

<llo_original>
// kernel: _relu_pallas_impl.1
$region0: #{_relu_pallas_impl.1}
  #allocation0 [shape = 'u32[]', space=smem, size = 0x4, offset = 0x4, fixed_abs, tag = 'smem constant byte address 0x4 - core index']
  #allocation1 [shape = 'u32[144,128]{1,0:T(1,128)}', space=vmem, size = 0x12000, scoped, tag = 'internal scratch']
  %s0 = inlined_call_operand.vmem [shape: f32[735,128], index: 0, kind: input, shape index: {}, may-alias: {0,1}]
  %s1 = inlined_call_operand.vmem [shape: f32[735,128], index: 1, kind: output, shape index: {}, may-alias: {0,1}]
  %s2 = sld [smem:[#allocation0]]
  $region14: #{_relu_pallas_impl.1} parent=0
    _
  %s4 = ssub.s32 1, %s2
  %s5 = scalar_select 0, %s4, %s2
  // Predicated region
  $region2: #{_relu_pallas_impl.1} parent=0 // pred_check
    _
  $region3: #{_relu_pallas_impl.1} parent=0 // pred_check_branch
    %7 = sbr.rel (0) target = $region5
  $region4: #{_relu_pallas_impl.1} parent=0 // pred_region
    _
  $region5: #{_relu_pallas_impl.1} parent=0 // pred_fallthru
    _
  %v8 = vld [vmem:[%s0] sm:$0xff]
  %v9 = vld [vmem:[%s0 + $0x8] sm:$0xff]
  %v10 = vld [vmem:[%s0 + $0x10] sm:$0xff]
  %v11 = vld [vmem:[%s0 + $0x18] sm:$0xff]
  %v12 = vld [vmem:[%s0 + $0x20] sm:$0xff]
  %v13 = vld [vmem:[%s0 + $0x28] sm:$0xff]
  %v14 = vld [vmem:[%s0 + $0x30] sm:$0xff]
  %v15 = vld [vmem:[%s0 + $0x38] sm:$0xff]
  %v16 = vld [vmem:[%s0 + $0x40] sm:$0xff]
  %v17 = vld [vmem:[%s0 + $0x48] sm:$0xff]
  %v18 = vld [vmem:[%s0 + $0x50] sm:$0xff]
  %v19 = vld [vmem:[%s0 + $0x58] sm:$0xff]
  %v20 = vld [vmem:[%s0 + $0x60] sm:$0xff]
  %v21 = vld [vmem:[%s0 + $0x68] sm:$0xff]
  %v22 = vld [vmem:[%s0 + $0x70] sm:$0xff]
  %v23 = vld [vmem:[%s0 + $0x78] sm:$0xff]
  %v24 = vld [vmem:[%s0 + $0x80] sm:$0xff]
  %v25 = vld [vmem:[%s0 + $0x88] sm:$0xff]
  %v26 = vld [vmem:[%s0 + $0x90] sm:$0xff]
  %v27 = vld [vmem:[%s0 + $0x98] sm:$0xff]
  %v28 = vld [vmem:[%s0 + $0xa0] sm:$0xff]
  %v29 = vld [vmem:[%s0 + $0xa8] sm:$0xff]
  %v30 = vld [vmem:[%s0 + $0xb0] sm:$0xff]
  %v31 = vld [vmem:[%s0 + $0xb8] sm:$0xff]
  %v32 = vld [vmem:[%s0 + $0xc0] sm:$0xff]
  %v33 = vld [vmem:[%s0 + $0xc8] sm:$0xff]
  %v34 = vld [vmem:[%s0 + $0xd0] sm:$0xff]
  %v35 = vld [vmem:[%s0 + $0xd8] sm:$0xff]
  %v36 = vld [vmem:[%s0 + $0xe0] sm:$0xff]
  %v37 = vld [vmem:[%s0 + $0xe8] sm:$0xff]
  %v38 = vld [vmem:[%s0 + $0xf0] sm:$0xff]
  %v39 = vld [vmem:[%s0 + $0xf8] sm:$0xff]
  %v40 = vld [vmem:[%s0 + $0x100] sm:$0xff]
  %v41 = vld [vmem:[%s0 + $0x108] sm:$0xff]
  %v42 = vld [vmem:[%s0 + $0x110] sm:$0xff]
  %v43 = vld [vmem:[%s0 + $0x118] sm:$0xff]
  %v44 = vld [vmem:[%s0 + $0x120] sm:$0xff]
  %v45 = vld [vmem:[%s0 + $0x128] sm:$0xff]
  %v46 = vld [vmem:[%s0 + $0x130] sm:$0xff]
  %v47 = vld [vmem:[%s0 + $0x138] sm:$0xff]
  %v48 = vld [vmem:[%s0 + $0x140] sm:$0xff]
  %v49 = vld [vmem:[%s0 + $0x148] sm:$0xff]
  %v50 = vld [vmem:[%s0 + $0x150] sm:$0xff]
  %v51 = vld [vmem:[%s0 + $0x158] sm:$0xff]
  %v52 = vld [vmem:[%s0 + $0x160] sm:$0xff]
  %v53 = vld [vmem:[%s0 + $0x168] sm:$0xff]
  %v54 = vld [vmem:[%s0 + $0x170] sm:$0xff]
  %v55 = vld [vmem:[%s0 + $0x178] sm:$0xff]
  %v56 = vld [vmem:[%s0 + $0x180] sm:$0xff]
  %v57 = vld [vmem:[%s0 + $0x188] sm:$0xff]
  %v58 = vld [vmem:[%s0 + $0x190] sm:$0xff]
  %v59 = vld [vmem:[%s0 + $0x198] sm:$0xff]
  %v60 = vld [vmem:[%s0 + $0x1a0] sm:$0xff]
  %v61 = vld [vmem:[%s0 + $0x1a8] sm:$0xff]
  %v62 = vld [vmem:[%s0 + $0x1b0] sm:$0xff]
  %v63 = vld [vmem:[%s0 + $0x1b8] sm:$0xff]
  %v64 = vld [vmem:[%s0 + $0x1c0] sm:$0xff]
  %v65 = vld [vmem:[%s0 + $0x1c8] sm:$0xff]
  %v66 = vld [vmem:[%s0 + $0x1d0] sm:$0xff]
  %v67 = vld [vmem:[%s0 + $0x1d8] sm:$0xff]
  %v68 = vld [vmem:[%s0 + $0x1e0] sm:$0xff]
  %v69 = vld [vmem:[%s0 + $0x1e8] sm:$0xff]
  %v70 = vld [vmem:[%s0 + $0x1f0] sm:$0xff]
  %v71 = vld [vmem:[%s0 + $0x1f8] sm:$0xff]
  %v72 = vld [vmem:[%s0 + $0x200] sm:$0xff]
  %v73 = vld [vmem:[%s0 + $0x208] sm:$0xff]
  %v74 = vld [vmem:[%s0 + $0x210] sm:$0xff]
  %v75 = vld [vmem:[%s0 + $0x218] sm:$0xff]
  %v76 = vld [vmem:[%s0 + $0x220] sm:$0xff]
  %v77 = vld [vmem:[%s0 + $0x228] sm:$0xff]
  %v78 = vld [vmem:[%s0 + $0x230] sm:$0xff]
  %v79 = vld [vmem:[%s0 + $0x238] sm:$0xff]
  %v80 = vld [vmem:[%s0 + $0x240] sm:$0xff]
  %v81 = vld [vmem:[%s0 + $0x248] sm:$0xff]
  %v82 = vld [vmem:[%s0 + $0x250] sm:$0xff]
  %v83 = vld [vmem:[%s0 + $0x258] sm:$0xff]
  %v84 = vld [vmem:[%s0 + $0x260] sm:$0xff]
  %v85 = vld [vmem:[%s0 + $0x268] sm:$0xff]
  %v86 = vld [vmem:[%s0 + $0x270] sm:$0xff]
  %v87 = vld [vmem:[%s0 + $0x278] sm:$0xff]
  %v88 = vld [vmem:[%s0 + $0x280] sm:$0xff]
  %v89 = vld [vmem:[%s0 + $0x288] sm:$0xff]
  %v90 = vld [vmem:[%s0 + $0x290] sm:$0xff]
  %v91 = vld [vmem:[%s0 + $0x298] sm:$0xff]
  %v92 = vld [vmem:[%s0 + $0x2a0] sm:$0xff]
  %v93 = vld [vmem:[%s0 + $0x2a8] sm:$0xff]
  %v94 = vld [vmem:[%s0 + $0x2b0] sm:$0xff]
  %v95 = vld [vmem:[%s0 + $0x2b8] sm:$0xff]
  %v96 = vld [vmem:[%s0 + $0x2c0] sm:$0xff]
  %v97 = vld [vmem:[%s0 + $0x2c8] sm:$0xff]
  %v98 = vld [vmem:[%s0 + $0x2d0] sm:$0xff]
  %v99 = vld [vmem:[%s0 + $0x2d8] sm:$0x7f]
  %v100 = vmax.f32 %v8, 0.0
  %v101 = vmax.f32 %v9, 0.0
  %v102 = vmax.f32 %v10, 0.0
  %v103 = vmax.f32 %v11, 0.0
  %v104 = vmax.f32 %v12, 0.0
  %v105 = vmax.f32 %v13, 0.0
  %v106 = vmax.f32 %v14, 0.0
  %v107 = vmax.f32 %v15, 0.0
  %v108 = vmax.f32 %v16, 0.0
  %v109 = vmax.f32 %v17, 0.0
  %v110 = vmax.f32 %v18, 0.0
  %v111 = vmax.f32 %v19, 0.0
  %v112 = vmax.f32 %v20, 0.0
  %v113 = vmax.f32 %v21, 0.0
  %v114 = vmax.f32 %v22, 0.0
  %v115 = vmax.f32 %v23, 0.0
  %v116 = vmax.f32 %v24, 0.0
  %v117 = vmax.f32 %v25, 0.0
  %v118 = vmax.f32 %v26, 0.0
  %v119 = vmax.f32 %v27, 0.0
  %v120 = vmax.f32 %v28, 0.0
  %v121 = vmax.f32 %v29, 0.0
  %v122 = vmax.f32 %v30, 0.0
  %v123 = vmax.f32 %v31, 0.0
  %v124 = vmax.f32 %v32, 0.0
  %v125 = vmax.f32 %v33, 0.0
  %v126 = vmax.f32 %v34, 0.0
  %v127 = vmax.f32 %v35, 0.0
  %v128 = vmax.f32 %v36, 0.0
  %v129 = vmax.f32 %v37, 0.0
  %v130 = vmax.f32 %v38, 0.0
  %v131 = vmax.f32 %v39, 0.0
  %v132 = vmax.f32 %v40, 0.0
  %v133 = vmax.f32 %v41, 0.0
  %v134 = vmax.f32 %v42, 0.0
  %v135 = vmax.f32 %v43, 0.0
  %v136 = vmax.f32 %v44, 0.0
  %v137 = vmax.f32 %v45, 0.0
  %v138 = vmax.f32 %v46, 0.0
  %v139 = vmax.f32 %v47, 0.0
  %v140 = vmax.f32 %v48, 0.0
  %v141 = vmax.f32 %v49, 0.0
  %v142 = vmax.f32 %v50, 0.0
  %v143 = vmax.f32 %v51, 0.0
  %v144 = vmax.f32 %v52, 0.0
  %v145 = vmax.f32 %v53, 0.0
  %v146 = vmax.f32 %v54, 0.0
  %v147 = vmax.f32 %v55, 0.0
  %v148 = vmax.f32 %v56, 0.0
  %v149 = vmax.f32 %v57, 0.0
  %v150 = vmax.f32 %v58, 0.0
  %v151 = vmax.f32 %v59, 0.0
  %v152 = vmax.f32 %v60, 0.0
  %v153 = vmax.f32 %v61, 0.0
  %v154 = vmax.f32 %v62, 0.0
  %v155 = vmax.f32 %v63, 0.0
  %v156 = vmax.f32 %v64, 0.0
  %v157 = vmax.f32 %v65, 0.0
  %v158 = vmax.f32 %v66, 0.0
  %v159 = vmax.f32 %v67, 0.0
  %v160 = vmax.f32 %v68, 0.0
  %v161 = vmax.f32 %v69, 0.0
  %v162 = vmax.f32 %v70, 0.0
  %v163 = vmax.f32 %v71, 0.0
  %v164 = vmax.f32 %v72, 0.0
  %v165 = vmax.f32 %v73, 0.0
  %v166 = vmax.f32 %v74, 0.0
  %v167 = vmax.f32 %v75, 0.0
  %v168 = vmax.f32 %v76, 0.0
  %v169 = vmax.f32 %v77, 0.0
  %v170 = vmax.f32 %v78, 0.0
  %v171 = vmax.f32 %v79, 0.0
  %v172 = vmax.f32 %v80, 0.0
  %v173 = vmax.f32 %v81, 0.0
  %v174 = vmax.f32 %v82, 0.0
  %v175 = vmax.f32 %v83, 0.0
  %v176 = vmax.f32 %v84, 0.0
  %v177 = vmax.f32 %v85, 0.0
  %v178 = vmax.f32 %v86, 0.0
  %v179 = vmax.f32 %v87, 0.0
  %v180 = vmax.f32 %v88, 0.0
  %v181 = vmax.f32 %v89, 0.0
  %v182 = vmax.f32 %v90, 0.0
  %v183 = vmax.f32 %v91, 0.0
  %v184 = vmax.f32 %v92, 0.0
  %v185 = vmax.f32 %v93, 0.0
  %v186 = vmax.f32 %v94, 0.0
  %v187 = vmax.f32 %v95, 0.0
  %v188 = vmax.f32 %v96, 0.0
  %v189 = vmax.f32 %v97, 0.0
  %v190 = vmax.f32 %v98, 0.0
  %v191 = vmax.f32 %v99, 0.0
  %192 = vst [vmem:[%s1] sm:$0xff] %v100
  %193 = vst [vmem:[%s1 + $0x8] sm:$0xff] %v101
  %194 = vst [vmem:[%s1 + $0x10] sm:$0xff] %v102
  %195 = vst [vmem:[%s1 + $0x18] sm:$0xff] %v103
  %196 = vst [vmem:[%s1 + $0x20] sm:$0xff] %v104
  %197 = vst [vmem:[%s1 + $0x28] sm:$0xff] %v105
  %198 = vst [vmem:[%s1 + $0x30] sm:$0xff] %v106
  %199 = vst [vmem:[%s1 + $0x38] sm:$0xff] %v107
  %200 = vst [vmem:[%s1 + $0x40] sm:$0xff] %v108
  %201 = vst [vmem:[%s1 + $0x48] sm:$0xff] %v109
  %202 = vst [vmem:[%s1 + $0x50] sm:$0xff] %v110
  %203 = vst [vmem:[%s1 + $0x58] sm:$0xff] %v111
  %204 = vst [vmem:[%s1 + $0x60] sm:$0xff] %v112
  %205 = vst [vmem:[%s1 + $0x68] sm:$0xff] %v113
  %206 = vst [vmem:[%s1 + $0x70] sm:$0xff] %v114
  %207 = vst [vmem:[%s1 + $0x78] sm:$0xff] %v115
  %208 = vst [vmem:[%s1 + $0x80] sm:$0xff] %v116
  %209 = vst [vmem:[%s1 + $0x88] sm:$0xff] %v117
  %210 = vst [vmem:[%s1 + $0x90] sm:$0xff] %v118
  %211 = vst [vmem:[%s1 + $0x98] sm:$0xff] %v119
  %212 = vst [vmem:[%s1 + $0xa0] sm:$0xff] %v120
  %213 = vst [vmem:[%s1 + $0xa8] sm:$0xff] %v121
  %214 = vst [vmem:[%s1 + $0xb0] sm:$0xff] %v122
  %215 = vst [vmem:[%s1 + $0xb8] sm:$0xff] %v123
  %216 = vst [vmem:[%s1 + $0xc0] sm:$0xff] %v124
  %217 = vst [vmem:[%s1 + $0xc8] sm:$0xff] %v125
  %218 = vst [vmem:[%s1 + $0xd0] sm:$0xff] %v126
  %219 = vst [vmem:[%s1 + $0xd8] sm:$0xff] %v127
  %220 = vst [vmem:[%s1 + $0xe0] sm:$0xff] %v128
  %221 = vst [vmem:[%s1 + $0xe8] sm:$0xff] %v129
  %222 = vst [vmem:[%s1 + $0xf0] sm:$0xff] %v130
  %223 = vst [vmem:[%s1 + $0xf8] sm:$0xff] %v131
  %224 = vst [vmem:[%s1 + $0x100] sm:$0xff] %v132
  %225 = vst [vmem:[%s1 + $0x108] sm:$0xff] %v133
  %226 = vst [vmem:[%s1 + $0x110] sm:$0xff] %v134
  %227 = vst [vmem:[%s1 + $0x118] sm:$0xff] %v135
  %228 = vst [vmem:[%s1 + $0x120] sm:$0xff] %v136
  %229 = vst [vmem:[%s1 + $0x128] sm:$0xff] %v137
  %230 = vst [vmem:[%s1 + $0x130] sm:$0xff] %v138
  %231 = vst [vmem:[%s1 + $0x138] sm:$0xff] %v139
  %232 = vst [vmem:[%s1 + $0x140] sm:$0xff] %v140
  %233 = vst [vmem:[%s1 + $0x148] sm:$0xff] %v141
  %234 = vst [vmem:[%s1 + $0x150] sm:$0xff] %v142
  %235 = vst [vmem:[%s1 + $0x158] sm:$0xff] %v143
  %236 = vst [vmem:[%s1 + $0x160] sm:$0xff] %v144
  %237 = vst [vmem:[%s1 + $0x168] sm:$0xff] %v145
  %238 = vst [vmem:[%s1 + $0x170] sm:$0xff] %v146
  %239 = vst [vmem:[%s1 + $0x178] sm:$0xff] %v147
  %240 = vst [vmem:[%s1 + $0x180] sm:$0xff] %v148
  %241 = vst [vmem:[%s1 + $0x188] sm:$0xff] %v149
  %242 = vst [vmem:[%s1 + $0x190] sm:$0xff] %v150
  %243 = vst [vmem:[%s1 + $0x198] sm:$0xff] %v151
  %244 = vst [vmem:[%s1 + $0x1a0] sm:$0xff] %v152
  %245 = vst [vmem:[%s1 + $0x1a8] sm:$0xff] %v153
  %246 = vst [vmem:[%s1 + $0x1b0] sm:$0xff] %v154
  %247 = vst [vmem:[%s1 + $0x1b8] sm:$0xff] %v155
  %248 = vst [vmem:[%s1 + $0x1c0] sm:$0xff] %v156
  %249 = vst [vmem:[%s1 + $0x1c8] sm:$0xff] %v157
  %250 = vst [vmem:[%s1 + $0x1d0] sm:$0xff] %v158
  %251 = vst [vmem:[%s1 + $0x1d8] sm:$0xff] %v159
  %252 = vst [vmem:[%s1 + $0x1e0] sm:$0xff] %v160
  %253 = vst [vmem:[%s1 + $0x1e8] sm:$0xff] %v161
  %254 = vst [vmem:[%s1 + $0x1f0] sm:$0xff] %v162
  %255 = vst [vmem:[%s1 + $0x1f8] sm:$0xff] %v163
  %256 = vst [vmem:[%s1 + $0x200] sm:$0xff] %v164
  %257 = vst [vmem:[%s1 + $0x208] sm:$0xff] %v165
  %258 = vst [vmem:[%s1 + $0x210] sm:$0xff] %v166
  %259 = vst [vmem:[%s1 + $0x218] sm:$0xff] %v167
  %260 = vst [vmem:[%s1 + $0x220] sm:$0xff] %v168
  %261 = vst [vmem:[%s1 + $0x228] sm:$0xff] %v169
  %262 = vst [vmem:[%s1 + $0x230] sm:$0xff] %v170
  %263 = vst [vmem:[%s1 + $0x238] sm:$0xff] %v171
  %264 = vst [vmem:[%s1 + $0x240] sm:$0xff] %v172
  %265 = vst [vmem:[%s1 + $0x248] sm:$0xff] %v173
  %266 = vst [vmem:[%s1 + $0x250] sm:$0xff] %v174
  %267 = vst [vmem:[%s1 + $0x258] sm:$0xff] %v175
  %268 = vst [vmem:[%s1 + $0x260] sm:$0xff] %v176
  %269 = vst [vmem:[%s1 + $0x268] sm:$0xff] %v177
  %270 = vst [vmem:[%s1 + $0x270] sm:$0xff] %v178
  %271 = vst [vmem:[%s1 + $0x278] sm:$0xff] %v179
  %272 = vst [vmem:[%s1 + $0x280] sm:$0xff] %v180
  %273 = vst [vmem:[%s1 + $0x288] sm:$0xff] %v181
  %274 = vst [vmem:[%s1 + $0x290] sm:$0xff] %v182
  %275 = vst [vmem:[%s1 + $0x298] sm:$0xff] %v183
  %276 = vst [vmem:[%s1 + $0x2a0] sm:$0xff] %v184
  %277 = vst [vmem:[%s1 + $0x2a8] sm:$0xff] %v185
  %278 = vst [vmem:[%s1 + $0x2b0] sm:$0xff] %v186
  %279 = vst [vmem:[%s1 + $0x2b8] sm:$0xff] %v187
  %280 = vst [vmem:[%s1 + $0x2c0] sm:$0xff] %v188
  %281 = vst [vmem:[%s1 + $0x2c8] sm:$0xff] %v189
  %282 = vst [vmem:[%s1 + $0x2d0] sm:$0xff] %v190
  %283 = vst [vmem:[%s1 + $0x2d8] sm:$0x7f] %v191
  // Predicated region
  $region6: #{_relu_pallas_impl.1} parent=0 // pred_check
    _
  $region7: #{_relu_pallas_impl.1} parent=0 // pred_check_branch
    %285 = sbr.rel (0) target = $region9
  $region8: #{_relu_pallas_impl.1} parent=0 // pred_region
    _
  $region9: #{_relu_pallas_impl.1} parent=0 // pred_fallthru
    _
  // Predicated region
  $region10: #{_relu_pallas_impl.1} parent=0 // pred_check
    _
  $region11: #{_relu_pallas_impl.1} parent=0 // pred_check_branch
    %287 = sbr.rel (0) target = $region13
  $region12: #{_relu_pallas_impl.1} parent=0 // pred_region
    _
  $region13: #{_relu_pallas_impl.1} parent=0 // pred_fallthru
    _

</llo_original>
